<compile_context>
chip_gen: v7x
topology: tpu7x:2x2x1
jax: 0.10.0
libtpu: 0.0.40
codegen_flags: <defaults>
</compile_context>

<pallas_src>
import jax
import jax.numpy as jnp
from jax.experimental import pallas as pl
from jax.experimental.pallas import tpu as pltpu


def _round_up(x: int, m: int) -> int:
    return ((x + m - 1) // m) * m


def _decoder_kernel(emb_ref, w_ref, b_ref, out_ref):
    # emb_ref: [TM, H] (bf16)  w_ref: [H, Np] (bf16)  b_ref: [1, Np] (f32)
    # out_ref: [TM, Np] (f32)
    logits = jnp.dot(emb_ref[...], w_ref[...],
                     preferred_element_type=jnp.float32)
    logits = logits + b_ref[...]  # bias is already f32; single broadcast/tile

    # Numerically stable log-softmax over the action axis (Categorical logits).
    # max/sum reductions -> XLU, exp/log -> EUP: hidden under MXU/DMA.
    m = jnp.max(logits, axis=-1, keepdims=True)
    shifted = logits - m
    sumexp = jnp.sum(jnp.exp(shifted), axis=-1, keepdims=True)
    out_ref[...] = (shifted - jnp.log(sumexp)).astype(out_ref.dtype)


def decoder_forward(emb: jax.Array, weight: jax.Array, bias: jax.Array,
                    *, block_b: int = 512,
                    mxu_dtype=jnp.bfloat16) -> jax.Array:
    """emb: [B, H]; weight: [H, N]; bias: [N]. Returns f32 log-probs [B, N]."""
    B, H = emb.shape
    H2, N = weight.shape
    assert H == H2 and bias.shape == (N,)

    # ---- action axis: lane-dense padding (multiple of 128) -----------------
    n_pad = _round_up(N, 128)

    # ---- batch tiling: minimize padding; >=2 tiles for big batches (v7x) ---
    tiles = pl.cdiv(B, block_b)
    if tiles == 1 and B >= 256:
        tiles = 2  # keep both v7x TensorCores busy
    sub = 16 if jnp.dtype(mxu_dtype) == jnp.dtype(jnp.bfloat16) else 8
    tm = _round_up(pl.cdiv(B, tiles), sub)

    # ---- VMEM budget: conservative 60 MiB (v7x has 64 MiB per TC) ----------
    itemsize = jnp.dtype(mxu_dtype).itemsize
    weight_bytes = H * n_pad * itemsize
    bias_bytes = n_pad * 4
    budget = 60 * 1024 * 1024

    def tile_bytes(t: int) -> int:
        # double-buffered emb tile + double-buffered f32 output tile
        return 2 * t * H * itemsize + 2 * t * n_pad * 4

    while tm > sub and weight_bytes + bias_bytes + tile_bytes(tm) > budget:
        tm = _round_up(max(tm // 2, sub), sub)
    # TODO(synk): if even the minimum tile does not fit (huge action space N),
    # fall back to an N-tiled grid with a two-pass / online log-softmax.
    assert weight_bytes + bias_bytes + tile_bytes(tm) <= budget, (
        "action space too large for the single-pass log-softmax row-block")

    b_pad = _round_up(B, tm)
    tiles = b_pad // tm

    # ---- operand prep ------------------------------------------------------
    # NOTE: padded action columns MUST have zero weight columns together with
    # the -1e30 bias so padded logits are ~-1e30 and vanish from the softmax.
    emb_p = jnp.pad(emb, ((0, b_pad - B), (0, 0))).astype(mxu_dtype)
    w_p = jnp.pad(weight, ((0, 0), (0, n_pad - N))).astype(mxu_dtype)
    b_p = jnp.pad(bias.reshape(1, N).astype(jnp.float32),
                  ((0, 0), (0, n_pad - N)), constant_values=-1e30)

    vmem_needed = weight_bytes + bias_bytes + tile_bytes(tm)
    vmem_limit = int(min(max(vmem_needed + (4 << 20), 16 << 20), 64 << 20))

    cost = pl.CostEstimate(
        flops=2 * b_pad * H * n_pad,
        transcendentals=b_pad * n_pad,
        bytes_accessed=(b_pad * H * itemsize + weight_bytes + bias_bytes
                        + b_pad * n_pad * 4),
    )

    out = pl.pallas_call(
        _decoder_kernel,
        out_shape=jax.ShapeDtypeStruct((b_pad, n_pad), jnp.float32),
        grid_spec=pltpu.PrefetchScalarGridSpec(
            num_scalar_prefetch=0,
            grid=(tiles,),
            in_specs=[
                # streamed batch tile (double-buffered by default)
                pl.BlockSpec((tm, H), lambda i: (i, 0)),
                # resident weight: constant index_map -> single buffer
                pl.BlockSpec((H, n_pad), lambda i: (0, 0),
                             pipeline_mode=pl.Buffered(1)),
                # resident bias: single buffer
                pl.BlockSpec((1, n_pad), lambda i: (0, 0),
                             pipeline_mode=pl.Buffered(1)),
            ],
            out_specs=pl.BlockSpec((tm, n_pad), lambda i: (i, 0)),
        ),
        compiler_params=pltpu.CompilerParams(
            dimension_semantics=("parallel",),
            vmem_limit_bytes=vmem_limit,
        ),
        cost_estimate=cost,
    )(emb_p, w_p, b_p)

    # Skip the lane-axis slice (extra read+write) when N is already 128-aligned.
    if n_pad == N:
        return out[:B]
    return out[:B, :N]


if __name__ == "__main__":
    # Small shapes consistent with the module: batch=8, embedding dim=32,
    # Discrete space with 16 actions.
    B, H, N = 8, 32, 16

    key = jax.random.PRNGKey(0)
    k_emb, k_w, k_b = jax.random.split(key, 3)

    emb = jax.random.normal(k_emb, (B, H), dtype=jnp.float32)
    weight = jax.random.normal(k_w, (H, N), dtype=jnp.float32) * (1.0 / jnp.sqrt(H))
    bias = jax.random.normal(k_b, (N,), dtype=jnp.float32) * 0.01

    log_probs = decoder_forward(emb, weight, bias)
    jax.block_until_ready(log_probs)

    # Reference 1: same arithmetic as the kernel (bf16 MXU feed, f32 accum).
    ref_logits = jnp.dot(emb.astype(jnp.bfloat16), weight.astype(jnp.bfloat16),
                         preferred_element_type=jnp.float32) + bias
    ref_bf16 = jax.nn.log_softmax(ref_logits, axis=-1)
    # Reference 2: pure f32 math (loose tolerance accounts for the bf16 feed).
    ref_f32 = jax.nn.log_softmax(emb @ weight + bias, axis=-1)

    assert log_probs.shape == (B, N)
    assert jnp.allclose(log_probs, ref_bf16, atol=1e-4, rtol=1e-4)
    assert jnp.allclose(log_probs, ref_f32, atol=5e-2, rtol=5e-2)
    # Log-probs should sum (in prob space) to ~1 per row.
    assert jnp.allclose(jnp.sum(jnp.exp(log_probs), axis=-1), 1.0, atol=1e-5)

    print("KERNEL_OK")
</pallas_src>

<mosaic_0001>
module attributes {stable_mosaic.version = 11 : i64} {
  func.func @_decoder_kernel(%arg0: i32, %arg1: memref<16x32xbf16, #tpu.memory_space<vmem>>, %arg2: memref<32x128xbf16, #tpu.memory_space<vmem>>, %arg3: memref<1x128xf32, #tpu.memory_space<vmem>>, %arg4: memref<16x128xf32, #tpu.memory_space<vmem>>) attributes {dimension_semantics = [#tpu.dimension_semantics<parallel>], iteration_bounds = array<i64: 1>, scalar_prefetch = 0 : i64, scratch_operands = 0 : i64, tpu.core_type = #tpu.core_type<tc>, window_params = [{transform_indices = @transform_0, window_bounds = array<i64: 16, 32>}, {pipeline_mode = #tpu.pipeline_mode<synchronous>, transform_indices = @transform_1, window_bounds = array<i64: 32, 128>}, {pipeline_mode = #tpu.pipeline_mode<synchronous>, transform_indices = @transform_2, window_bounds = array<i64: 1, 128>}, {transform_indices = @transform_3, window_bounds = array<i64: 16, 128>}]} {
    %c0 = arith.constant 0 : index
    %c0_0 = arith.constant 0 : index
    %0 = vector.load %arg1[%c0, %c0_0] : memref<16x32xbf16, #tpu.memory_space<vmem>>, vector<16x32xbf16>
    %c0_1 = arith.constant 0 : index
    %c0_2 = arith.constant 0 : index
    %1 = vector.load %arg2[%c0_1, %c0_2] : memref<32x128xbf16, #tpu.memory_space<vmem>>, vector<32x128xbf16>
    %cst = arith.constant dense<0.000000e+00> : vector<16x128xf32>
    %2 = tpu.matmul %0, %1, %cst {dimension_numbers = #tpu.dot_dimension_numbers<[1], [0], [0], [1], [0, 0, 1, 1], [], []>} : vector<16x32xbf16>, vector<32x128xbf16>, vector<16x128xf32> -> vector<16x128xf32>
    %c0_3 = arith.constant 0 : index
    %c0_4 = arith.constant 0 : index
    %3 = vector.load %arg3[%c0_3, %c0_4] : memref<1x128xf32, #tpu.memory_space<vmem>>, vector<1x128xf32>
    %4 = vector.broadcast %3 : vector<1x128xf32> to vector<16x128xf32>
    %5 = arith.addf %2, %4 : vector<16x128xf32>
    %cst_5 = arith.constant dense<0xFF800000> : vector<16xf32>
    %6 = vector.multi_reduction <maximumf>, %5, %cst_5 [1] : vector<16x128xf32> to vector<16xf32>
    %7 = vector.shape_cast %6 : vector<16xf32> to vector<16x1xf32>
    %8 = vector.broadcast %7 : vector<16x1xf32> to vector<16x128xf32>
    %9 = arith.subf %5, %8 : vector<16x128xf32>
    %10 = math.exp %9 : vector<16x128xf32>
    %cst_6 = arith.constant dense<0.000000e+00> : vector<16xf32>
    %11 = vector.multi_reduction <add>, %10, %cst_6 [1] : vector<16x128xf32> to vector<16xf32>
    %12 = vector.shape_cast %11 : vector<16xf32> to vector<16x1xf32>
    %13 = math.log %12 : vector<16x1xf32>
    %14 = vector.broadcast %13 : vector<16x1xf32> to vector<16x128xf32>
    %15 = arith.subf %9, %14 : vector<16x128xf32>
    %c0_7 = arith.constant 0 : index
    %c0_8 = arith.constant 0 : index
    %16 = vector.load %arg4[%c0_7, %c0_8] : memref<16x128xf32, #tpu.memory_space<vmem>>, vector<16x128xf32>
    tpu.vector_store %arg4[%c0_7, %c0_8], %15 {strides = array<i32>} : memref<16x128xf32, #tpu.memory_space<vmem>>, vector<16x128xf32>,
    return
  }
  func.func @transform_0(%arg0: i32) -> (i32, i32) {
    %c0_i32 = arith.constant 0 : i32
    %c0_i32_0 = arith.constant 0 : i32
    return %arg0, %c0_i32 : i32, i32
  }
  func.func @transform_1(%arg0: i32) -> (i32, i32) {
    %c0_i32 = arith.constant 0 : i32
    %c0_i32_0 = arith.constant 0 : i32
    %c0_i32_1 = arith.constant 0 : i32
    return %c0_i32, %c0_i32_0 : i32, i32
  }
  func.func @transform_2(%arg0: i32) -> (i32, i32) {
    %c0_i32 = arith.constant 0 : i32
    %c0_i32_0 = arith.constant 0 : i32
    %c0_i32_1 = arith.constant 0 : i32
    return %c0_i32, %c0_i32_0 : i32, i32
  }
  func.func @transform_3(%arg0: i32) -> (i32, i32) {
    %c0_i32 = arith.constant 0 : i32
    %c0_i32_0 = arith.constant 0 : i32
    return %arg0, %c0_i32 : i32, i32
  }
}

</mosaic_0001>

<llo_original>
// kernel: tpu_custom_call.1
$region0: #{tpu_custom_call.1}
  #allocation0 [shape = 'u32[]', space=smem, size = 0x4, offset = 0x4, fixed_abs, tag = 'smem constant byte address 0x4 - core index']
  #allocation1 [shape = 'u32[144,128]{1,0:T(1,128)}', space=vmem, size = 0x12000, scoped, tag = 'internal scratch']
  %s0 = inlined_call_operand.hbm [shape: bf16[16,32], index: 0, kind: input, shape index: {}]
  %s1 = inlined_call_operand.hbm [shape: bf16[32,128], index: 1, kind: input, shape index: {}]
  %s2 = inlined_call_operand.vmem [shape: f32[1,128], index: 2, kind: input, shape index: {}]
  %s3 = inlined_call_operand.hbm [shape: f32[16,128], index: 3, kind: output, shape index: {}]
  %s4 = sld [smem:[#allocation0]]
  $region30: #{tpu_custom_call.1} parent=0
    _
  %s6 = ssub.s32 1, %s4
  %s7 = scalar_select 0, %s6, %s4
  $region1: #{tpu_custom_call.1} parent=0
    #allocation2 [shape = 'u8[4096]{0}', space=vmem, size = 0x1000, scoped, tag = 'input window, operand 0, single buffered']
    #allocation3 [shape = 's32[1]{0}', space=sflag, size = 0x4, scoped, tag = 'scoped memory for tpu_custom_call.1']
    #allocation4 [shape = 's32[1]{0}', space=sflag, size = 0x4, scoped, tag = 'scoped memory for tpu_custom_call.1']
    #allocation5 [shape = 'u8[8192]{0}', space=vmem, size = 0x2000, scoped, tag = 'input window, operand 1, single buffered']
    #allocation6 [shape = 's32[1]{0}', space=sflag, size = 0x4, scoped, tag = 'scoped memory for tpu_custom_call.1']
    #allocation7 [shape = 'u8[8192]{0}', space=vmem, size = 0x2000, scoped, tag = 'output window, operand 0, single buffered']
    %8 = vsyncpa [#allocation3], 0
    %9 = vsyncpa [#allocation6], 0
    %10 = vsyncpa [#allocation4], 0
    // Predicated region
    $region2: #{tpu_custom_call.1} parent=1 // pred_check
      _
    $region3: #{tpu_custom_call.1} parent=1 // pred_check_branch
      %12 = sbr.rel (0) target = $region5
    $region4: #{tpu_custom_call.1} parent=1 // pred_region
      %s14 = ssub.s32 128, 128
      %15 = vsyncadd [#allocation3], %s14
      %s16 = sshll.u32 [#allocation2], 4
      %s17 = int_to_ptr.vmem [resolvable:$true] %s16
      %22 = dma.hbm_to_vmem [thread:$0]  %s0, 128, %s17, [#allocation3], 64, 64, 4
    $region5: #{tpu_custom_call.1} parent=1 // pred_fallthru
      _
    // Predicated region
    $region6: #{tpu_custom_call.1} parent=1 // pred_check
      _
    $region7: #{tpu_custom_call.1} parent=1 // pred_check_branch
      %24 = sbr.rel (0) target = $region9
    $region8: #{tpu_custom_call.1} parent=1 // pred_region
      %s26 = ssub.s32 256, 256
      %27 = vsyncadd [#allocation6], %s26
      %s28 = sshll.u32 [#allocation5], 4
      %s29 = int_to_ptr.vmem [resolvable:$true] %s28
      %34 = dma.hbm_to_vmem [thread:$0]  %s1, 256, %s29, [#allocation6], 64, 64, 4
    $region9: #{tpu_custom_call.1} parent=1 // pred_fallthru
      _
    // Predicated region
    $region10: #{tpu_custom_call.1} parent=1 // pred_check
      _
    $region11: #{tpu_custom_call.1} parent=1 // pred_check_branch
      %36 = sbr.rel (0) target = $region13
    $region12: #{tpu_custom_call.1} parent=1 // pred_region
      _
    $region13: #{tpu_custom_call.1} parent=1 // pred_fallthru
      _
    // Predicated region
    $region14: #{tpu_custom_call.1} parent=1 // pred_check
      _
    $region15: #{tpu_custom_call.1} parent=1 // pred_check_branch
      %38 = sbr.rel (0) target = $region17
    $region16: #{tpu_custom_call.1} parent=1 // pred_region
      %39 = dma.done [#allocation3], 128
    $region17: #{tpu_custom_call.1} parent=1 // pred_fallthru
      _
    // Predicated region
    $region18: #{tpu_custom_call.1} parent=1 // pred_check
      _
    $region19: #{tpu_custom_call.1} parent=1 // pred_check_branch
      %41 = sbr.rel (0) target = $region21
    $region20: #{tpu_custom_call.1} parent=1 // pred_region
      %42 = dma.done [#allocation6], 256
    $region21: #{tpu_custom_call.1} parent=1 // pred_fallthru
      _
    %v44 = vld [vmem:[#allocation2] sm:$0xf]
    %v45 = vld [vmem:[#allocation2 + $0x4] sm:$0xf]
    %v46 = vld [vmem:[#allocation5] sm:$0xf]
    %v47 = vld [vmem:[#allocation5 + $0x4] sm:$0xf]
    %v48 = vld [vmem:[#allocation5 + $0x8] sm:$0xf]
    %v49 = vld [vmem:[#allocation5 + $0xc] sm:$0xf]
    %v50 = vld [vmem:[%s2] sm:$0x1]
    %v52 = vlaneseq
    %v53 = vshrl.u32 %v52, 7
    %v54 = vsub.s32 0, %v53
    %v55 = vrot.slane %v50, %v54
    %v59 = vunpack.c.l.b16 %v44
    %v60 = vunpack.c.l.b16 %v45
    %v61 = vpack.c.b16 %v60, %v59
    %v66 = vunpack.c.l.b16 %v46
    %v67 = vunpack.c.l.b16 %v47
    %v68 = vunpack.c.l.b16 %v48
    %v69 = vunpack.c.l.b16 %v49
    %v70 = vpack.c.b16 %v67, %v66
    %v71 = vpack.c.b16 %v69, %v68
    %vm74 = vcmask 261120
    %v76 = vsel %vm74, %v61, 0
    %78 = vmatprep.subr.bf16.mxu0 0
    %79 = vmatpush1.bf16.msra.mxu0 %v70
    %80 = vmatprep.subr.bf16.mxu0 0
    %81 = vmatpush1.bf16.msra.mxu0 %v71
    %82 = vmatprep.subr.bf16.mxu0 0
    %83 = vmatpush1.bf16.msra.mxu0 0
    %84 = vmatprep.subr.bf16.mxu0 0
    %85 = vmatpush1.bf16.msra.mxu0 0
    %86 = vmatprep.subr.bf16.mxu0 0
    %87 = vmatpush1.bf16.msra.mxu0 0
    %88 = vmatprep.subr.bf16.mxu0 0
    %89 = vmatpush1.bf16.msra.mxu0 0
    %90 = vmatprep.subr.bf16.mxu0 0
    %91 = vmatpush1.bf16.msra.mxu0 0
    %92 = vmatprep.subr.bf16.mxu0 0
    %93 = vmatpush1.bf16.msra.mxu0 0
    %94 = vmatprep.subr.bf16.mxu0 0
    %95 = vmatpush1.bf16.msra.mxu0 0
    %96 = vmatprep.subr.bf16.mxu0 0
    %97 = vmatpush1.bf16.msra.mxu0 0
    %98 = vmatprep.subr.bf16.mxu0 0
    %99 = vmatpush1.bf16.msra.mxu0 0
    %100 = vmatprep.subr.bf16.mxu0 0
    %101 = vmatpush1.bf16.msra.mxu0 0
    %102 = vmatprep.subr.bf16.mxu0 0
    %103 = vmatpush1.bf16.msra.mxu0 0
    %104 = vmatprep.subr.bf16.mxu0 0
    %105 = vmatpush1.bf16.msra.mxu0 0
    %106 = vmatprep.subr.bf16.mxu0 0
    %107 = vmatpush1.bf16.msra.mxu0 0
    %108 = vmatprep.subr.bf16.mxu0 0
    %109 = vmatpush1.bf16.msra.mxu0 0
    %110 = vmatprep.mubr.bf16.mxu0 0
    %111 = vmatmul.mubr.bf16.gmra.mrb[0].mxu0 %v76
    %v112 = vpop.f32.mrb[0].mxu0
    %v113 = vadd.f32 %v55, %v112
    %v114 = vpop.f32.mrb[0].mxu0
    %v115 = vpop.f32.mrb[0].mxu0
    %v116 = vadd.f32 %v55, %v115
    %v117 = vpop.f32.mrb[0].mxu0
    %118 = vdwg.mxu0
    %119 = vmax.xlane.f32.xlu0 %v113
    %v120 = vpop.xlane.xlu0 %119
    %121 = vmax.xlane.f32.xlu0 %v116
    %v122 = vpop.xlane.xlu0 %121
    %v123 = vsub.f32 %v113, %v120
    %v124 = vsub.f32 %v116, %v122
    %v125 = vmul.f32 %v123, 1.442695
    %v126 = vpow.pop %v125
    %v127 = vmul.f32 %v124, 1.442695
    %v128 = vpow.pop %v127
    %129 = vadd.xlane.f32.xlu0 %v126
    %v130 = vpop.xlane.xlu0 %129
    %131 = vadd.xlane.f32.xlu0 %v128
    %v132 = vpop.xlane.xlu0 %131
    %v133 = vlog2.pop %v130
    %v134 = vmul.f32 %v133, 0.6931472
    %v135 = vlog2.pop %v132
    %v136 = vmul.f32 %v135, 0.6931472
    %v137 = vsub.f32 %v123, %v134
    %v138 = vsub.f32 %v124, %v136
    %139 = vst [vmem:[#allocation7] sm:$0xff] %v137
    %140 = vst [vmem:[#allocation7 + $0x8] sm:$0xff] %v138
    // Predicated region
    $region22: #{tpu_custom_call.1} parent=1 // pred_check
      _
    $region23: #{tpu_custom_call.1} parent=1 // pred_check_branch
      %142 = sbr.rel (0) target = $region25
    $region24: #{tpu_custom_call.1} parent=1 // pred_region
      %s144 = ssub.s32 256, 256
      %145 = vsyncadd [#allocation4], %s144
      %s146 = sshll.u32 [#allocation7], 4
      %s147 = int_to_ptr.vmem [resolvable:$true] %s146
      %152 = dma.vmem_to_hbm [thread:$0]  %s147, 256, %s3, [#allocation4], 128, 128, 8
    $region25: #{tpu_custom_call.1} parent=1 // pred_fallthru
      _
    // Predicated region
    $region26: #{tpu_custom_call.1} parent=1 // pred_check
      _
    $region27: #{tpu_custom_call.1} parent=1 // pred_check_branch
      %154 = sbr.rel (0) target = $region29
    $region28: #{tpu_custom_call.1} parent=1 // pred_region
      %155 = dma.done [#allocation4], 256
    $region29: #{tpu_custom_call.1} parent=1 // pred_fallthru
      _
    %156 = vsyncpa [#allocation3], 1
    %157 = vsyncpa [#allocation6], 1
    %158 = vsyncpa [#allocation4], 1

</llo_original>
